<compile_context>
chip_gen: v7x
topology: tpu7x:2x2x1
jax: 0.10.0
libtpu: 0.0.40
codegen_flags: <defaults>
</compile_context>

<pallas_src>
import jax
import jax.numpy as jnp
from jax.experimental import pallas as pl
from jax.experimental.pallas import tpu as pltpu


def _round_up(x, m):
    return ((x + m - 1) // m) * m


def _outconv_tile_kernel(x_ref, w_ref, b_ref, o_ref):
    # x_ref: (1, C_in, T)  spatial tile (lanes = spatial)
    # w_ref: (N, C_in)     full weight (torch Linear layout)
    # b_ref: (N, 1)        full bias, broadcast along lanes
    # o_ref: (1, N, T)     output tile
    acc = jnp.dot(w_ref[...], x_ref[0], preferred_element_type=jnp.float32)
    o_ref[0] = (acc + b_ref[...]).astype(o_ref.dtype)


def _outconv_batched_kernel(x_ref, w_ref, b_ref, o_ref):
    # Whole problem in one step: x_ref (B, C_in, HW), o_ref (B, N, HW).
    # Static unroll over B avoids any in-kernel transpose/relayout.
    w = w_ref[...]
    bias = b_ref[...]
    for b in range(x_ref.shape[0]):
        acc = jnp.dot(w, x_ref[b], preferred_element_type=jnp.float32)
        o_ref[b] = (acc + bias).astype(o_ref.dtype)


def outconv_pallas(x_nchw, weight, bias, *,
                   vmem_budget_bytes=12 * 1024 * 1024,   # double-buffered in+out
                   max_tile_lanes=262144,
                   small_threshold_bytes=2 * 1024 * 1024):
    """x_nchw: (B, C_in, H, W); weight: (n_classes, C_in); bias: (n_classes,)."""
    B, C_in, H, W = x_nchw.shape
    N = weight.shape[0]
    HW = H * W

    x = x_nchw.reshape(B, C_in, HW)          # spatial on lanes, no transpose
    b2 = bias.reshape(N, 1)
    dtype = x.dtype
    itemsize = jnp.dtype(dtype).itemsize

    # ---- small case: one grid step for the whole problem -------------------
    total_bytes = (B * C_in * HW + B * N * HW) * itemsize
    if total_bytes <= small_threshold_bytes:
        out = pl.pallas_call(
            _outconv_batched_kernel,
            out_shape=jax.ShapeDtypeStruct((B, N, HW), dtype),
            grid_spec=pltpu.PrefetchScalarGridSpec(
                num_scalar_prefetch=0,
                grid=(1,),
                in_specs=[
                    pl.BlockSpec((B, C_in, HW), lambda i: (0, 0, 0)),
                    pl.BlockSpec((N, C_in), lambda i: (0, 0)),
                    pl.BlockSpec((N, 1), lambda i: (0, 0)),
                ],
                out_specs=pl.BlockSpec((B, N, HW), lambda i: (0, 0, 0)),
            ),
            compiler_params=pltpu.CompilerParams(
                dimension_semantics=("arbitrary",)),
        )(x, weight, b2)
        return out.reshape(B, N, H, W)

    # ---- general tiled path -------------------------------------------------
    # Lane tile sized from the VMEM budget (input + output, double-buffered).
    bytes_per_lane = (C_in + N) * itemsize * 2
    tile = vmem_budget_bytes // bytes_per_lane
    tile = max(128, (tile // 128) * 128)
    tile = min(tile, max_tile_lanes, _round_up(HW, 128))
    nt = pl.cdiv(HW, tile)                    # ragged tail handled by masking

    out = pl.pallas_call(
        _outconv_tile_kernel,
        out_shape=jax.ShapeDtypeStruct((B, N, HW), dtype),
        grid_spec=pltpu.PrefetchScalarGridSpec(
            num_scalar_prefetch=0,
            # Flat parallel grid so v7x's two TensorCores both get work
            # even when B == 1.
            grid=(B * nt,),
            in_specs=[
                pl.BlockSpec((1, C_in, tile), lambda i: (i // nt, 0, i % nt)),
                pl.BlockSpec((N, C_in), lambda i: (0, 0)),
                pl.BlockSpec((N, 1), lambda i: (0, 0)),
            ],
            out_specs=pl.BlockSpec((1, N, tile), lambda i: (i // nt, 0, i % nt)),
        ),
        compiler_params=pltpu.CompilerParams(
            dimension_semantics=("parallel",)),
    )(x, weight, b2)
    return out.reshape(B, N, H, W)


def unet_decode_forward(xlist, weight, bias):
    """Matches UNet_decode.forward: consumes only x4up3 (the last entry)."""
    x4, x4up1, x4up2, x4up3 = xlist
    return outconv_pallas(x4up3, weight, bias)


if __name__ == "__main__":
    key = jax.random.PRNGKey(0)
    B, C_in, H, W = 2, 8, 16, 16       # channel[0] = 8
    n_classes = 4

    k_x, k_w, k_b = jax.random.split(key, 3)
    x4up3 = jax.random.normal(k_x, (B, C_in, H, W), dtype=jnp.float32)
    xlist = (
        jnp.zeros((B, C_in, H, W), jnp.float32),
        jnp.zeros((B, C_in, H, W), jnp.float32),
        jnp.zeros((B, C_in, H, W), jnp.float32),
        x4up3,
    )

    # nn.Linear default init: U(-1/sqrt(in), 1/sqrt(in))
    bound = 1.0 / jnp.sqrt(jnp.array(C_in, jnp.float32))
    weight = jax.random.uniform(k_w, (n_classes, C_in), jnp.float32, -bound, bound)
    bias = jax.random.uniform(k_b, (n_classes,), jnp.float32, -bound, bound)

    ref = jnp.einsum("bchw,nc->bnhw", x4up3, weight) + bias[None, :, None, None]

    # 1) Module forward (small path: single grid step).
    out = jax.block_until_ready(unet_decode_forward(xlist, weight, bias))
    assert out.shape == (B, n_classes, H, W)
    assert jnp.allclose(out, ref, atol=1e-5, rtol=1e-5)

    # 2) Force the general tiled path (flat parallel grid) on the same shape.
    out_t = jax.block_until_ready(
        outconv_pallas(x4up3, weight, bias, small_threshold_bytes=0))
    assert jnp.allclose(out_t, ref, atol=1e-5, rtol=1e-5)

    # 3) Ragged spatial size (H*W not a multiple of 128): small path.
    Hr, Wr = 10, 10
    xr = jax.random.normal(k_x, (B, C_in, Hr, Wr), dtype=jnp.float32)
    ref_r = jnp.einsum("bchw,nc->bnhw", xr, weight) + bias[None, :, None, None]
    out_r = jax.block_until_ready(outconv_pallas(xr, weight, bias))
    assert out_r.shape == (B, n_classes, Hr, Wr)
    assert jnp.allclose(out_r, ref_r, atol=1e-5, rtol=1e-5)

    # 4) Ragged spatial size through the tiled path (masked tail write-back).
    out_rt = jax.block_until_ready(
        outconv_pallas(xr, weight, bias, small_threshold_bytes=0))
    assert jnp.allclose(out_rt, ref_r, atol=1e-5, rtol=1e-5)

    print("KERNEL_OK")
</pallas_src>

<mosaic_0001>
module attributes {stable_mosaic.version = 11 : i64} {
  func.func @_outconv_batched_kernel(%arg0: i32, %arg1: memref<2x8x256xf32, #tpu.memory_space<vmem>>, %arg2: memref<4x8xf32, #tpu.memory_space<vmem>>, %arg3: memref<4x1xf32, #tpu.memory_space<vmem>>, %arg4: memref<2x4x256xf32, #tpu.memory_space<vmem>>) attributes {dimension_semantics = [#tpu.dimension_semantics<arbitrary>], iteration_bounds = array<i64: 1>, scalar_prefetch = 0 : i64, scratch_operands = 0 : i64, tpu.core_type = #tpu.core_type<tc>, window_params = [{pipeline_mode = #tpu.pipeline_mode<synchronous>, transform_indices = @transform_0, window_bounds = array<i64: 2, 8, 256>}, {pipeline_mode = #tpu.pipeline_mode<synchronous>, transform_indices = @transform_1, window_bounds = array<i64: 4, 8>}, {pipeline_mode = #tpu.pipeline_mode<synchronous>, transform_indices = @transform_2, window_bounds = array<i64: 4, 1>}, {pipeline_mode = #tpu.pipeline_mode<synchronous>, transform_indices = @transform_3, window_bounds = array<i64: 2, 4, 256>}]} {
    %c0 = arith.constant 0 : index
    %c0_0 = arith.constant 0 : index
    %0 = vector.load %arg2[%c0, %c0_0] : memref<4x8xf32, #tpu.memory_space<vmem>>, vector<4x8xf32>
    %c0_1 = arith.constant 0 : index
    %c0_2 = arith.constant 0 : index
    %1 = vector.load %arg3[%c0_1, %c0_2] : memref<4x1xf32, #tpu.memory_space<vmem>>, vector<4x1xf32>
    %c0_3 = arith.constant 0 : index
    %c0_4 = arith.constant 0 : index
    %c0_5 = arith.constant 0 : index
    %2 = vector.load %arg1[%c0_3, %c0_4, %c0_5] : memref<2x8x256xf32, #tpu.memory_space<vmem>>, vector<1x8x256xf32>
    %3 = vector.shape_cast %2 : vector<1x8x256xf32> to vector<8x256xf32>
    %cst = arith.constant dense<0.000000e+00> : vector<4x256xf32>
    %4 = tpu.matmul %0, %3, %cst {dimension_numbers = #tpu.dot_dimension_numbers<[1], [0], [0], [1], [0, 0, 1, 1], [], []>} : vector<4x8xf32>, vector<8x256xf32>, vector<4x256xf32> -> vector<4x256xf32>
    %5 = vector.broadcast %1 : vector<4x1xf32> to vector<4x256xf32>
    %6 = arith.addf %4, %5 : vector<4x256xf32>
    %c0_6 = arith.constant 0 : index
    %c0_7 = arith.constant 0 : index
    %c0_8 = arith.constant 0 : index
    %7 = vector.load %arg4[%c0_6, %c0_7, %c0_8] : memref<2x4x256xf32, #tpu.memory_space<vmem>>, vector<1x4x256xf32>
    %8 = vector.shape_cast %7 : vector<1x4x256xf32> to vector<4x256xf32>
    %9 = vector.shape_cast %6 : vector<4x256xf32> to vector<1x4x256xf32>
    tpu.vector_store %arg4[%c0_6, %c0_7, %c0_8], %9 {strides = array<i32>} : memref<2x4x256xf32, #tpu.memory_space<vmem>>, vector<1x4x256xf32>,
    %c1 = arith.constant 1 : index
    %c0_9 = arith.constant 0 : index
    %c0_10 = arith.constant 0 : index
    %10 = vector.load %arg1[%c1, %c0_9, %c0_10] : memref<2x8x256xf32, #tpu.memory_space<vmem>>, vector<1x8x256xf32>
    %11 = vector.shape_cast %10 : vector<1x8x256xf32> to vector<8x256xf32>
    %cst_11 = arith.constant dense<0.000000e+00> : vector<4x256xf32>
    %12 = tpu.matmul %0, %11, %cst_11 {dimension_numbers = #tpu.dot_dimension_numbers<[1], [0], [0], [1], [0, 0, 1, 1], [], []>} : vector<4x8xf32>, vector<8x256xf32>, vector<4x256xf32> -> vector<4x256xf32>
    %13 = vector.broadcast %1 : vector<4x1xf32> to vector<4x256xf32>
    %14 = arith.addf %12, %13 : vector<4x256xf32>
    %c1_12 = arith.constant 1 : index
    %c0_13 = arith.constant 0 : index
    %c0_14 = arith.constant 0 : index
    %15 = vector.load %arg4[%c1_12, %c0_13, %c0_14] : memref<2x4x256xf32, #tpu.memory_space<vmem>>, vector<1x4x256xf32>
    %16 = vector.shape_cast %15 : vector<1x4x256xf32> to vector<4x256xf32>
    %17 = vector.shape_cast %14 : vector<4x256xf32> to vector<1x4x256xf32>
    tpu.vector_store %arg4[%c1_12, %c0_13, %c0_14], %17 {strides = array<i32>} : memref<2x4x256xf32, #tpu.memory_space<vmem>>, vector<1x4x256xf32>,
    return
  }
  func.func @transform_0(%arg0: i32) -> (i32, i32, i32) {
    %c0_i32 = arith.constant 0 : i32
    %c0_i32_0 = arith.constant 0 : i32
    %c0_i32_1 = arith.constant 0 : i32
    %c0_i32_2 = arith.constant 0 : i32
    return %c0_i32, %c0_i32_0, %c0_i32_1 : i32, i32, i32
  }
  func.func @transform_1(%arg0: i32) -> (i32, i32) {
    %c0_i32 = arith.constant 0 : i32
    %c0_i32_0 = arith.constant 0 : i32
    %c0_i32_1 = arith.constant 0 : i32
    return %c0_i32, %c0_i32_0 : i32, i32
  }
  func.func @transform_2(%arg0: i32) -> (i32, i32) {
    %c0_i32 = arith.constant 0 : i32
    %c0_i32_0 = arith.constant 0 : i32
    %c0_i32_1 = arith.constant 0 : i32
    return %c0_i32, %c0_i32_0 : i32, i32
  }
  func.func @transform_3(%arg0: i32) -> (i32, i32, i32) {
    %c0_i32 = arith.constant 0 : i32
    %c0_i32_0 = arith.constant 0 : i32
    %c0_i32_1 = arith.constant 0 : i32
    %c0_i32_2 = arith.constant 0 : i32
    return %c0_i32, %c0_i32_0, %c0_i32_1 : i32, i32, i32
  }
}

</mosaic_0001>

<llo_original>
// kernel: tpu_custom_call.1
$region0: #{tpu_custom_call.1}
  #allocation0 [shape = 'u32[]', space=smem, size = 0x4, offset = 0x4, fixed_abs, tag = 'smem constant byte address 0x4 - core index']
  #allocation1 [shape = 'u32[144,128]{1,0:T(1,128)}', space=vmem, size = 0x12000, scoped, tag = 'internal scratch']
  %s0 = inlined_call_operand.hbm [shape: f32[2,8,256], index: 0, kind: input, shape index: {}]
  %s1 = inlined_call_operand.vmem [shape: f32[4,8], index: 1, kind: input, shape index: {}]
  %s2 = inlined_call_operand.vmem [shape: f32[4,1], index: 2, kind: input, shape index: {}]
  %s3 = inlined_call_operand.hbm [shape: f32[2,4,256], index: 3, kind: output, shape index: {}]
  %s4 = sld [smem:[#allocation0]]
  $region26: #{tpu_custom_call.1} parent=0
    _
  %s6 = ssub.s32 1, %s4
  %s7 = scalar_select 0, %s6, %s4
  $region1: #{tpu_custom_call.1} parent=0
    #allocation2 [shape = 'u8[16384]{0}', space=vmem, size = 0x4000, scoped, tag = 'input window, operand 0, single buffered']
    #allocation3 [shape = 's32[1]{0}', space=sflag, size = 0x4, scoped, tag = 'scoped memory for tpu_custom_call.1']
    #allocation4 [shape = 's32[1]{0}', space=sflag, size = 0x4, scoped, tag = 'scoped memory for tpu_custom_call.1']
    #allocation5 [shape = 'u8[8192]{0}', space=vmem, size = 0x2000, scoped, tag = 'output window, operand 0, single buffered']
    %8 = vsyncpa [#allocation3], 0
    %9 = vsyncpa [#allocation4], 0
    // Predicated region
    $region2: #{tpu_custom_call.1} parent=1 // pred_check
      _
    $region3: #{tpu_custom_call.1} parent=1 // pred_check_branch
      %11 = sbr.rel (0) target = $region5
    $region4: #{tpu_custom_call.1} parent=1 // pred_region
      %s13 = ssub.s32 512, 512
      %14 = vsyncadd [#allocation3], %s13
      %s15 = sshll.u32 [#allocation2], 4
      %s16 = int_to_ptr.vmem [resolvable:$true] %s15
      %21 = dma.hbm_to_vmem [thread:$0]  %s0, 512, %s16, [#allocation3], 256, 256, 16
    $region5: #{tpu_custom_call.1} parent=1 // pred_fallthru
      _
    // Predicated region
    $region6: #{tpu_custom_call.1} parent=1 // pred_check
      _
    $region7: #{tpu_custom_call.1} parent=1 // pred_check_branch
      %23 = sbr.rel (0) target = $region9
    $region8: #{tpu_custom_call.1} parent=1 // pred_region
      _
    $region9: #{tpu_custom_call.1} parent=1 // pred_fallthru
      _
    // Predicated region
    $region10: #{tpu_custom_call.1} parent=1 // pred_check
      _
    $region11: #{tpu_custom_call.1} parent=1 // pred_check_branch
      %25 = sbr.rel (0) target = $region13
    $region12: #{tpu_custom_call.1} parent=1 // pred_region
      _
    $region13: #{tpu_custom_call.1} parent=1 // pred_fallthru
      _
    // Predicated region
    $region14: #{tpu_custom_call.1} parent=1 // pred_check
      _
    $region15: #{tpu_custom_call.1} parent=1 // pred_check_branch
      %27 = sbr.rel (0) target = $region17
    $region16: #{tpu_custom_call.1} parent=1 // pred_region
      %28 = dma.done [#allocation3], 512
    $region17: #{tpu_custom_call.1} parent=1 // pred_fallthru
      _
    %v29 = vld [vmem:[%s1] sm:$0xf]
    %v30 = vld [vmem:[%s2] sm:$0xf]
    %v31 = vld [vmem:[#allocation2] sm:$0xff]
    %v32 = vld [vmem:[#allocation2 + $0x8] sm:$0xff]
    %34 = vset.pattern.permute.xlu0 0
    %35 = vperm.xlu0 %34, %v30
    %v36 = vpop.permute.xlu0 %35
    %vm38 = vcmask 64512
    %v40 = vsel %vm38, %v29, 0
    %42 = vmatprep.subr.mxu0 %v32
    %43 = vmatpush1.msra.mxu0 %v31
    %44 = vmatprep.subr.mxu0 0.0
    %45 = vmatpush1.msra.mxu0 0.0
    %46 = vmatprep.subr.mxu0 0.0
    %47 = vmatpush1.msra.mxu0 0.0
    %48 = vmatprep.subr.mxu0 0.0
    %49 = vmatpush1.msra.mxu0 0.0
    %50 = vmatprep.subr.mxu0 0.0
    %51 = vmatpush1.msra.mxu0 0.0
    %52 = vmatprep.subr.mxu0 0.0
    %53 = vmatpush1.msra.mxu0 0.0
    %54 = vmatprep.subr.mxu0 0.0
    %55 = vmatpush1.msra.mxu0 0.0
    %56 = vmatprep.subr.mxu0 0.0
    %57 = vmatpush1.msra.mxu0 0.0
    %58 = vmatprep.subr.mxu0 0.0
    %59 = vmatpush1.msra.mxu0 0.0
    %60 = vmatprep.subr.mxu0 0.0
    %61 = vmatpush1.msra.mxu0 0.0
    %62 = vmatprep.subr.mxu0 0.0
    %63 = vmatpush1.msra.mxu0 0.0
    %64 = vmatprep.subr.mxu0 0.0
    %65 = vmatpush1.msra.mxu0 0.0
    %66 = vmatprep.subr.mxu0 0.0
    %67 = vmatpush1.msra.mxu0 0.0
    %68 = vmatprep.subr.mxu0 0.0
    %69 = vmatpush1.msra.mxu0 0.0
    %70 = vmatprep.subr.mxu0 0.0
    %71 = vmatpush1.msra.mxu0 0.0
    %72 = vmatprep.subr.mxu0 0.0
    %73 = vmatpush1.msra.mxu0 0.0
    %74 = vmatprep.subr.mxu0 0.0
    %75 = vmatpush1.msra.mxu0 0.0
    %76 = vmatprep.subr.mxu0 0.0
    %77 = vmatpush1.msra.mxu0 0.0
    %78 = vmatprep.subr.mxu0 0.0
    %79 = vmatpush1.msra.mxu0 0.0
    %80 = vmatprep.subr.mxu0 0.0
    %81 = vmatpush1.msra.mxu0 0.0
    %82 = vmatprep.subr.mxu0 0.0
    %83 = vmatpush1.msra.mxu0 0.0
    %84 = vmatprep.subr.mxu0 0.0
    %85 = vmatpush1.msra.mxu0 0.0
    %86 = vmatprep.subr.mxu0 0.0
    %87 = vmatpush1.msra.mxu0 0.0
    %88 = vmatprep.subr.mxu0 0.0
    %89 = vmatpush1.msra.mxu0 0.0
    %90 = vmatprep.subr.mxu0 0.0
    %91 = vmatpush1.msra.mxu0 0.0
    %92 = vmatprep.subr.mxu0 0.0
    %93 = vmatpush1.msra.mxu0 0.0
    %94 = vmatprep.subr.mxu0 0.0
    %95 = vmatpush1.msra.mxu0 0.0
    %96 = vmatprep.subr.mxu0 0.0
    %97 = vmatpush1.msra.mxu0 0.0
    %98 = vmatprep.subr.mxu0 0.0
    %99 = vmatpush1.msra.mxu0 0.0
    %100 = vmatprep.subr.mxu0 0.0
    %101 = vmatpush1.msra.mxu0 0.0
    %102 = vmatprep.subr.mxu0 0.0
    %103 = vmatpush1.msra.mxu0 0.0
    %104 = vmatprep.subr.mxu0 0.0
    %105 = vmatpush1.msra.mxu0 0.0
    %106 = vmatprep.mubr.f32.mxu0 0.0
    %107 = vmatmul.mubr.f32.gmra.mrb[0].mxu0 %v40
    %v108 = vpop.f32.mrb[0].mxu0
    %v109 = vadd.f32 %v36, %v108
    %v110 = vpop.f32.mrb[0].mxu0
    %v111 = vadd.f32 %v36, %v110
    %112 = vdwg.mxu0
    %v115 = vcombine.low %v109, %v111
    %117 = vst [vmem:[#allocation5] sm:$0xff] %v115
    %s118 = scalar_lea.vmem [#allocation2], 16
    %v119 = vld [vmem:[%s118] sm:$0xff]
    %v120 = vld [vmem:[%s118 + $0x8] sm:$0xff]
    %121 = vmatprep.subr.mxu0 %v120
    %122 = vmatpush1.msra.mxu0 %v119
    %123 = vmatprep.subr.mxu0 0.0
    %124 = vmatpush1.msra.mxu0 0.0
    %125 = vmatprep.subr.mxu0 0.0
    %126 = vmatpush1.msra.mxu0 0.0
    %127 = vmatprep.subr.mxu0 0.0
    %128 = vmatpush1.msra.mxu0 0.0
    %129 = vmatprep.subr.mxu0 0.0
    %130 = vmatpush1.msra.mxu0 0.0
    %131 = vmatprep.subr.mxu0 0.0
    %132 = vmatpush1.msra.mxu0 0.0
    %133 = vmatprep.subr.mxu0 0.0
    %134 = vmatpush1.msra.mxu0 0.0
    %135 = vmatprep.subr.mxu0 0.0
    %136 = vmatpush1.msra.mxu0 0.0
    %137 = vmatprep.subr.mxu0 0.0
    %138 = vmatpush1.msra.mxu0 0.0
    %139 = vmatprep.subr.mxu0 0.0
    %140 = vmatpush1.msra.mxu0 0.0
    %141 = vmatprep.subr.mxu0 0.0
    %142 = vmatpush1.msra.mxu0 0.0
    %143 = vmatprep.subr.mxu0 0.0
    %144 = vmatpush1.msra.mxu0 0.0
    %145 = vmatprep.subr.mxu0 0.0
    %146 = vmatpush1.msra.mxu0 0.0
    %147 = vmatprep.subr.mxu0 0.0
    %148 = vmatpush1.msra.mxu0 0.0
    %149 = vmatprep.subr.mxu0 0.0
    %150 = vmatpush1.msra.mxu0 0.0
    %151 = vmatprep.subr.mxu0 0.0
    %152 = vmatpush1.msra.mxu0 0.0
    %153 = vmatprep.subr.mxu0 0.0
    %154 = vmatpush1.msra.mxu0 0.0
    %155 = vmatprep.subr.mxu0 0.0
    %156 = vmatpush1.msra.mxu0 0.0
    %157 = vmatprep.subr.mxu0 0.0
    %158 = vmatpush1.msra.mxu0 0.0
    %159 = vmatprep.subr.mxu0 0.0
    %160 = vmatpush1.msra.mxu0 0.0
    %161 = vmatprep.subr.mxu0 0.0
    %162 = vmatpush1.msra.mxu0 0.0
    %163 = vmatprep.subr.mxu0 0.0
    %164 = vmatpush1.msra.mxu0 0.0
    %165 = vmatprep.subr.mxu0 0.0
    %166 = vmatpush1.msra.mxu0 0.0
    %167 = vmatprep.subr.mxu0 0.0
    %168 = vmatpush1.msra.mxu0 0.0
    %169 = vmatprep.subr.mxu0 0.0
    %170 = vmatpush1.msra.mxu0 0.0
    %171 = vmatprep.subr.mxu0 0.0
    %172 = vmatpush1.msra.mxu0 0.0
    %173 = vmatprep.subr.mxu0 0.0
    %174 = vmatpush1.msra.mxu0 0.0
    %175 = vmatprep.subr.mxu0 0.0
    %176 = vmatpush1.msra.mxu0 0.0
    %177 = vmatprep.subr.mxu0 0.0
    %178 = vmatpush1.msra.mxu0 0.0
    %179 = vmatprep.subr.mxu0 0.0
    %180 = vmatpush1.msra.mxu0 0.0
    %181 = vmatprep.subr.mxu0 0.0
    %182 = vmatpush1.msra.mxu0 0.0
    %183 = vmatprep.subr.mxu0 0.0
    %184 = vmatpush1.msra.mxu0 0.0
    %185 = vmatprep.mubr.f32.mxu0 0.0
    %186 = vmatmul.mubr.f32.gmra.mrb[0].mxu0 %v40
    %v187 = vpop.f32.mrb[0].mxu0
    %v188 = vadd.f32 %v36, %v187
    %v189 = vpop.f32.mrb[0].mxu0
    %v190 = vadd.f32 %v36, %v189
    %191 = vdwg.mxu0
    %v194 = vcombine.low %v188, %v190
    %s196 = scalar_lea.vmem [#allocation5], 8
    %197 = vst [vmem:[%s196] sm:$0xff] %v194
    // Predicated region
    $region18: #{tpu_custom_call.1} parent=1 // pred_check
      _
    $region19: #{tpu_custom_call.1} parent=1 // pred_check_branch
      %199 = sbr.rel (0) target = $region21
    $region20: #{tpu_custom_call.1} parent=1 // pred_region
      %s201 = ssub.s32 256, 256
      %202 = vsyncadd [#allocation4], %s201
      %s203 = sshll.u32 [#allocation5], 4
      %s204 = int_to_ptr.vmem [resolvable:$true] %s203
      %209 = dma.vmem_to_hbm [thread:$0]  %s204, 256, %s3, [#allocation4], 128, 128, 8
    $region21: #{tpu_custom_call.1} parent=1 // pred_fallthru
      _
    // Predicated region
    $region22: #{tpu_custom_call.1} parent=1 // pred_check
      _
    $region23: #{tpu_custom_call.1} parent=1 // pred_check_branch
      %211 = sbr.rel (0) target = $region25
    $region24: #{tpu_custom_call.1} parent=1 // pred_region
      %212 = dma.done [#allocation4], 256
    $region25: #{tpu_custom_call.1} parent=1 // pred_fallthru
      _
    %213 = vsyncpa [#allocation3], 1
    %214 = vsyncpa [#allocation4], 1

</llo_original>
